<compile_context>
chip_gen: v7x
topology: tpu7x:2x2x1
jax: 0.10.0
libtpu: 0.0.40
codegen_flags: <defaults>
</compile_context>

<pallas_src>
import jax
import jax.numpy as jnp
from jax.experimental import pallas as pl
from jax.experimental.pallas import tpu as pltpu

LANE = 128
SUBLANE = 8


def _round_up(n, m):
    return ((n + m - 1) // m) * m


def mlp_kernel(x_ref, w1_ref, b1_ref, w2_ref, b2_ref, w3_ref, b3_ref, o_ref):
    # bf16 matmul operands on the MXU, f32 accumulation.
    x = x_ref[...].astype(jnp.bfloat16)

    h1 = jnp.dot(x, w1_ref[...], preferred_element_type=jnp.float32)
    # bias-add in f32 (accumulator dtype), ReLU in bf16: halves the largest
    # temporaries; identical result to relu-then-cast.
    h1 = jnp.maximum((h1 + b1_ref[...]).astype(jnp.bfloat16), 0.0)

    h2 = jnp.dot(h1, w2_ref[...], preferred_element_type=jnp.float32)
    h2 = jnp.maximum((h2 + b2_ref[...]).astype(jnp.bfloat16), 0.0)

    o = jnp.dot(h2, w3_ref[...], preferred_element_type=jnp.float32)
    o_ref[...] = (o + b3_ref[...]).astype(o_ref.dtype)


def _choose_tile(B, block_b):
    """Batch tile: sublane-aligned, overhead-amortizing, megacore-friendly."""
    block_b = max(SUBLANE, (block_b // SUBLANE) * SUBLANE)
    b_align = _round_up(max(B, 1), SUBLANE)
    tb = min(block_b, b_align)
    # Give megacore (v7x) at least 2 batch tiles when the batch permits.
    if b_align >= 2 * SUBLANE:
        tb = min(tb, _round_up(b_align // 2, SUBLANE))
    # Bound dead-row padding to ~12.5% of B (never shrink below 256 rows).
    while tb > 256 and (_round_up(B, tb) - B) * 8 > B:
        tb = _round_up(tb // 2, SUBLANE)
    return tb


def neural_net_forward(x, kernel_params, num_classes, *, block_b=4096):
    """Fused 3-layer MLP forward.

    `kernel_params` are the padded bf16 weights / f32 biases from
    `init_params` (hidden widths padded to 128 lanes, output width padded to
    8).  Returns the real (B, num_classes) output.
    """
    w1, b1, w2, b2, w3, b3 = kernel_params
    B, f_in = x.shape
    d1 = w1.shape[1]
    d2 = w2.shape[1]
    d3 = w3.shape[1]  # = round_up(num_classes, 8): narrow f32 output

    tb = _choose_tile(B, block_b)
    b_pad = _round_up(B, tb)
    if b_pad != B:
        x = jnp.pad(x, ((0, b_pad - B), (0, 0)))

    # Weights / biases stay VMEM-resident across all batch tiles.
    def resident(a):
        return pl.BlockSpec(a.shape, lambda i: (0,) * a.ndim)

    flops = 2 * b_pad * (f_in * d1 + d1 * d2 + d2 * d3)
    bytes_accessed = (
        b_pad * f_in * x.dtype.itemsize                       # x read
        + sum(int(p.size) * p.dtype.itemsize for p in kernel_params)
        + b_pad * d3 * 4                                      # narrow f32 out
    )

    out = pl.pallas_call(
        mlp_kernel,
        out_shape=jax.ShapeDtypeStruct((b_pad, d3), jnp.float32),
        grid=(b_pad // tb,),
        in_specs=[
            pl.BlockSpec((tb, f_in), lambda i: (i, 0)),   # x tile per grid step
            resident(w1), resident(b1),
            resident(w2), resident(b2),
            resident(w3), resident(b3),
        ],
        out_specs=pl.BlockSpec((tb, d3), lambda i: (i, 0)),
        compiler_params=pltpu.CompilerParams(
            dimension_semantics=("parallel",),  # batch tiles across TCs (v7x)
        ),
        cost_estimate=pl.CostEstimate(
            flops=flops, transcendentals=0, bytes_accessed=bytes_accessed),
    )(x, w1, b1, w2, b2, w3, b3)

    # Tiny slice: out is only (b_pad, 8) f32 now, not a 128-wide padded slab.
    return out[:B, :num_classes]


def init_params(key, input_size, hidden_size, num_classes=1):
    """nn.Linear-style U(-1/sqrt(fan_in), +1/sqrt(fan_in)) init.

    Returns (real_params, kernel_params):
      real_params   : f32, true layer shapes (for the reference).
      kernel_params : hidden widths zero-padded to 128 lanes, output width to 8;
                      weights bf16, biases f32 (what the kernel consumes).
    """
    h1 = hidden_size * 10
    h2 = hidden_size * 1
    dims = [(input_size, h1), (h1, h2), (h2, num_classes)]

    real = []
    for fan_in, fan_out in dims:
        key, kw, kb = jax.random.split(key, 3)
        bound = 1.0 / float(fan_in) ** 0.5
        w = jax.random.uniform(kw, (fan_in, fan_out), jnp.float32, -bound, bound)
        b = jax.random.uniform(kb, (1, fan_out), jnp.float32, -bound, bound)
        real.extend([w, b])

    # Padded copies (extra rows/cols are zeros -> exact through ReLU/slice).
    d1 = _round_up(h1, LANE)
    d2 = _round_up(h2, LANE)
    d3 = _round_up(num_classes, SUBLANE)   # narrow output: 8, not 128
    padded_dims = [(input_size, d1), (d1, d2), (d2, d3)]

    kernel_params = []
    for (w, b), (pi, po) in zip(zip(real[0::2], real[1::2]), padded_dims):
        wp = jnp.zeros((pi, po), jnp.float32).at[: w.shape[0], : w.shape[1]].set(w)
        bp = jnp.zeros((1, po), jnp.float32).at[:, : b.shape[1]].set(b)
        kernel_params.extend([wp.astype(jnp.bfloat16), bp])

    return tuple(real), tuple(kernel_params)


def reference_forward_f32(x, params):
    w1, b1, w2, b2, w3, b3 = params
    h1 = jnp.maximum(x @ w1 + b1, 0.0)
    h2 = jnp.maximum(h1 @ w2 + b2, 0.0)
    return h2 @ w3 + b3


def reference_forward_bf16(x, params):
    # Same numerics as the kernel: bf16 matmul operands, f32 accumulate.
    w1, b1, w2, b2, w3, b3 = params

    def lin(a, w, b):
        return jnp.dot(a.astype(jnp.bfloat16), w.astype(jnp.bfloat16),
                       preferred_element_type=jnp.float32) + b

    h1 = jnp.maximum(lin(x, w1, b1), 0.0)
    h2 = jnp.maximum(lin(h1, w2, b2), 0.0)
    return lin(h2, w3, b3)


if __name__ == "__main__":
    batch = 8
    input_size = 32
    hidden_size = 16   # fc1 width = 160 (padded 256), fc2 width = 16 (padded 128)
    num_classes = 1    # padded to 8 in the kernel, sliced back to 1

    key = jax.random.PRNGKey(0)
    key, kx = jax.random.split(key)
    x = jax.random.normal(kx, (batch, input_size), jnp.float32)
    real_params, kernel_params = init_params(key, input_size, hidden_size, num_classes)

    out = neural_net_forward(x, kernel_params, num_classes)
    out = jax.block_until_ready(out)

    assert out.shape == (batch, num_classes)

    # Tight check vs a reference using identical bf16-operand numerics.
    ref_bf16 = reference_forward_bf16(x, real_params)
    assert jnp.allclose(out, ref_bf16, atol=2e-3, rtol=2e-3), "mismatch vs bf16 reference"

    # Loose check vs the pure-f32 PyTorch-equivalent forward (bf16 rounding only).
    ref_f32 = reference_forward_f32(x, real_params)
    assert jnp.allclose(out, ref_f32, atol=5e-2, rtol=5e-2), "mismatch vs f32 reference"

    print("KERNEL_OK")
</pallas_src>

<mosaic_0001>
module attributes {stable_mosaic.version = 11 : i64} {
  func.func @mlp_kernel(%arg0: i32, %arg1: memref<8x32xf32, #tpu.memory_space<vmem>>, %arg2: memref<32x256xbf16, #tpu.memory_space<vmem>>, %arg3: memref<1x256xf32, #tpu.memory_space<vmem>>, %arg4: memref<256x128xbf16, #tpu.memory_space<vmem>>, %arg5: memref<1x128xf32, #tpu.memory_space<vmem>>, %arg6: memref<128x8xbf16, #tpu.memory_space<vmem>>, %arg7: memref<1x8xf32, #tpu.memory_space<vmem>>, %arg8: memref<8x8xf32, #tpu.memory_space<vmem>>) attributes {dimension_semantics = [#tpu.dimension_semantics<parallel>], iteration_bounds = array<i64: 1>, scalar_prefetch = 0 : i64, scratch_operands = 0 : i64, tpu.core_type = #tpu.core_type<tc>, window_params = [{transform_indices = @transform_0, window_bounds = array<i64: 8, 32>}, {pipeline_mode = #tpu.pipeline_mode<synchronous>, transform_indices = @transform_1, window_bounds = array<i64: 32, 256>}, {pipeline_mode = #tpu.pipeline_mode<synchronous>, transform_indices = @transform_2, window_bounds = array<i64: 1, 256>}, {pipeline_mode = #tpu.pipeline_mode<synchronous>, transform_indices = @transform_3, window_bounds = array<i64: 256, 128>}, {pipeline_mode = #tpu.pipeline_mode<synchronous>, transform_indices = @transform_4, window_bounds = array<i64: 1, 128>}, {pipeline_mode = #tpu.pipeline_mode<synchronous>, transform_indices = @transform_5, window_bounds = array<i64: 128, 8>}, {pipeline_mode = #tpu.pipeline_mode<synchronous>, transform_indices = @transform_6, window_bounds = array<i64: 1, 8>}, {transform_indices = @transform_7, window_bounds = array<i64: 8, 8>}]} {
    %c0 = arith.constant 0 : index
    %c0_0 = arith.constant 0 : index
    %0 = vector.load %arg1[%c0, %c0_0] : memref<8x32xf32, #tpu.memory_space<vmem>>, vector<8x32xf32>
    %1 = arith.truncf %0 : vector<8x32xf32> to vector<8x32xbf16>
    %c0_1 = arith.constant 0 : index
    %c0_2 = arith.constant 0 : index
    %2 = vector.load %arg2[%c0_1, %c0_2] : memref<32x256xbf16, #tpu.memory_space<vmem>>, vector<32x256xbf16>
    %cst = arith.constant dense<0.000000e+00> : vector<8x256xf32>
    %3 = tpu.matmul %1, %2, %cst {dimension_numbers = #tpu.dot_dimension_numbers<[1], [0], [0], [1], [0, 0, 1, 1], [], []>} : vector<8x32xbf16>, vector<32x256xbf16>, vector<8x256xf32> -> vector<8x256xf32>
    %c0_3 = arith.constant 0 : index
    %c0_4 = arith.constant 0 : index
    %4 = vector.load %arg3[%c0_3, %c0_4] : memref<1x256xf32, #tpu.memory_space<vmem>>, vector<1x256xf32>
    %5 = vector.broadcast %4 : vector<1x256xf32> to vector<8x256xf32>
    %6 = arith.addf %3, %5 : vector<8x256xf32>
    %7 = arith.truncf %6 : vector<8x256xf32> to vector<8x256xbf16>
    %cst_5 = arith.constant 0.000000e+00 : bf16
    %8 = vector.broadcast %cst_5 : bf16 to vector<8x256xbf16>
    %9 = arith.maximumf %7, %8 : vector<8x256xbf16>
    %c0_6 = arith.constant 0 : index
    %c0_7 = arith.constant 0 : index
    %10 = vector.load %arg4[%c0_6, %c0_7] : memref<256x128xbf16, #tpu.memory_space<vmem>>, vector<256x128xbf16>
    %cst_8 = arith.constant dense<0.000000e+00> : vector<8x128xf32>
    %11 = tpu.matmul %9, %10, %cst_8 {dimension_numbers = #tpu.dot_dimension_numbers<[1], [0], [0], [1], [0, 0, 1, 1], [], []>} : vector<8x256xbf16>, vector<256x128xbf16>, vector<8x128xf32> -> vector<8x128xf32>
    %c0_9 = arith.constant 0 : index
    %c0_10 = arith.constant 0 : index
    %12 = vector.load %arg5[%c0_9, %c0_10] : memref<1x128xf32, #tpu.memory_space<vmem>>, vector<1x128xf32>
    %13 = vector.broadcast %12 : vector<1x128xf32> to vector<8x128xf32>
    %14 = arith.addf %11, %13 : vector<8x128xf32>
    %15 = arith.truncf %14 : vector<8x128xf32> to vector<8x128xbf16>
    %cst_11 = arith.constant 0.000000e+00 : bf16
    %16 = vector.broadcast %cst_11 : bf16 to vector<8x128xbf16>
    %17 = arith.maximumf %15, %16 : vector<8x128xbf16>
    %c0_12 = arith.constant 0 : index
    %c0_13 = arith.constant 0 : index
    %18 = vector.load %arg6[%c0_12, %c0_13] : memref<128x8xbf16, #tpu.memory_space<vmem>>, vector<128x8xbf16>
    %cst_14 = arith.constant dense<0.000000e+00> : vector<8x8xf32>
    %19 = tpu.matmul %17, %18, %cst_14 {dimension_numbers = #tpu.dot_dimension_numbers<[1], [0], [0], [1], [0, 0, 1, 1], [], []>} : vector<8x128xbf16>, vector<128x8xbf16>, vector<8x8xf32> -> vector<8x8xf32>
    %c0_15 = arith.constant 0 : index
    %c0_16 = arith.constant 0 : index
    %20 = vector.load %arg7[%c0_15, %c0_16] : memref<1x8xf32, #tpu.memory_space<vmem>>, vector<1x8xf32>
    %21 = vector.broadcast %20 : vector<1x8xf32> to vector<8x8xf32>
    %22 = arith.addf %19, %21 : vector<8x8xf32>
    %c0_17 = arith.constant 0 : index
    %c0_18 = arith.constant 0 : index
    %23 = vector.load %arg8[%c0_17, %c0_18] : memref<8x8xf32, #tpu.memory_space<vmem>>, vector<8x8xf32>
    tpu.vector_store %arg8[%c0_17, %c0_18], %22 {strides = array<i32>} : memref<8x8xf32, #tpu.memory_space<vmem>>, vector<8x8xf32>,
    return
  }
  func.func @transform_0(%arg0: i32) -> (i32, i32) {
    %c0_i32 = arith.constant 0 : i32
    %c0_i32_0 = arith.constant 0 : i32
    return %arg0, %c0_i32 : i32, i32
  }
  func.func @transform_1(%arg0: i32) -> (i32, i32) {
    %c0_i32 = arith.constant 0 : i32
    %c0_i32_0 = arith.constant 0 : i32
    %c0_i32_1 = arith.constant 0 : i32
    return %c0_i32, %c0_i32_0 : i32, i32
  }
  func.func @transform_2(%arg0: i32) -> (i32, i32) {
    %c0_i32 = arith.constant 0 : i32
    %c0_i32_0 = arith.constant 0 : i32
    %c0_i32_1 = arith.constant 0 : i32
    return %c0_i32, %c0_i32_0 : i32, i32
  }
  func.func @transform_3(%arg0: i32) -> (i32, i32) {
    %c0_i32 = arith.constant 0 : i32
    %c0_i32_0 = arith.constant 0 : i32
    %c0_i32_1 = arith.constant 0 : i32
    return %c0_i32, %c0_i32_0 : i32, i32
  }
  func.func @transform_4(%arg0: i32) -> (i32, i32) {
    %c0_i32 = arith.constant 0 : i32
    %c0_i32_0 = arith.constant 0 : i32
    %c0_i32_1 = arith.constant 0 : i32
    return %c0_i32, %c0_i32_0 : i32, i32
  }
  func.func @transform_5(%arg0: i32) -> (i32, i32) {
    %c0_i32 = arith.constant 0 : i32
    %c0_i32_0 = arith.constant 0 : i32
    %c0_i32_1 = arith.constant 0 : i32
    return %c0_i32, %c0_i32_0 : i32, i32
  }
  func.func @transform_6(%arg0: i32) -> (i32, i32) {
    %c0_i32 = arith.constant 0 : i32
    %c0_i32_0 = arith.constant 0 : i32
    %c0_i32_1 = arith.constant 0 : i32
    return %c0_i32, %c0_i32_0 : i32, i32
  }
  func.func @transform_7(%arg0: i32) -> (i32, i32) {
    %c0_i32 = arith.constant 0 : i32
    %c0_i32_0 = arith.constant 0 : i32
    return %arg0, %c0_i32 : i32, i32
  }
}

</mosaic_0001>

<llo_original>
// kernel: tpu_custom_call.1
$region0: #{tpu_custom_call.1}
  #allocation0 [shape = 'u32[]', space=smem, size = 0x4, offset = 0x4, fixed_abs, tag = 'smem constant byte address 0x4 - core index']
  #allocation1 [shape = 'u32[144,128]{1,0:T(1,128)}', space=vmem, size = 0x12000, scoped, tag = 'internal scratch']
  %s0 = inlined_call_operand.vmem [shape: f32[8,32], index: 0, kind: input, shape index: {}]
  %s1 = inlined_call_operand.vmem [shape: bf16[32,256], index: 1, kind: input, shape index: {}]
  %s2 = inlined_call_operand.vmem [shape: f32[1,256], index: 2, kind: input, shape index: {}]
  %s3 = inlined_call_operand.hbm [shape: bf16[256,128], index: 3, kind: input, shape index: {}]
  %s4 = inlined_call_operand.vmem [shape: f32[1,128], index: 4, kind: input, shape index: {}]
  %s5 = inlined_call_operand.vmem [shape: bf16[128,8], index: 5, kind: input, shape index: {}]
  %s6 = inlined_call_operand.vmem [shape: f32[1,8], index: 6, kind: input, shape index: {}]
  %s7 = inlined_call_operand.hbm [shape: f32[8,8], index: 7, kind: output, shape index: {}]
  %s8 = sld [smem:[#allocation0]]
  $region42: #{tpu_custom_call.1} parent=0
    _
  %s10 = ssub.s32 1, %s8
  %s11 = scalar_select 0, %s10, %s8
  $region1: #{tpu_custom_call.1} parent=0
    #allocation2 [shape = 'u8[65536]{0}', space=vmem, size = 0x10000, scoped, tag = 'input window, operand 3, single buffered']
    #allocation3 [shape = 's32[1]{0}', space=sflag, size = 0x4, scoped, tag = 'scoped memory for tpu_custom_call.1']
    #allocation4 [shape = 's32[1]{0}', space=sflag, size = 0x4, scoped, tag = 'scoped memory for tpu_custom_call.1']
    #allocation5 [shape = 'u8[4096]{0}', space=vmem, size = 0x1000, scoped, tag = 'output window, operand 0, single buffered']
    %12 = vsyncpa [#allocation3], 0
    %13 = vsyncpa [#allocation4], 0
    // Predicated region
    $region2: #{tpu_custom_call.1} parent=1 // pred_check
      _
    $region3: #{tpu_custom_call.1} parent=1 // pred_check_branch
      %15 = sbr.rel (0) target = $region5
    $region4: #{tpu_custom_call.1} parent=1 // pred_region
      _
    $region5: #{tpu_custom_call.1} parent=1 // pred_fallthru
      _
    // Predicated region
    $region6: #{tpu_custom_call.1} parent=1 // pred_check
      _
    $region7: #{tpu_custom_call.1} parent=1 // pred_check_branch
      %17 = sbr.rel (0) target = $region9
    $region8: #{tpu_custom_call.1} parent=1 // pred_region
      _
    $region9: #{tpu_custom_call.1} parent=1 // pred_fallthru
      _
    // Predicated region
    $region10: #{tpu_custom_call.1} parent=1 // pred_check
      _
    $region11: #{tpu_custom_call.1} parent=1 // pred_check_branch
      %19 = sbr.rel (0) target = $region13
    $region12: #{tpu_custom_call.1} parent=1 // pred_region
      _
    $region13: #{tpu_custom_call.1} parent=1 // pred_fallthru
      _
    // Predicated region
    $region14: #{tpu_custom_call.1} parent=1 // pred_check
      _
    $region15: #{tpu_custom_call.1} parent=1 // pred_check_branch
      %21 = sbr.rel (0) target = $region17
    $region16: #{tpu_custom_call.1} parent=1 // pred_region
      %s23 = ssub.s32 2048, 2048
      %24 = vsyncadd [#allocation3], %s23
      %s25 = sshll.u32 [#allocation2], 4
      %s26 = int_to_ptr.vmem [resolvable:$true] %s25
      %31 = dma.hbm_to_vmem [thread:$0]  %s3, 2048, %s26, [#allocation3], 64, 64, 4
    $region17: #{tpu_custom_call.1} parent=1 // pred_fallthru
      _
    // Predicated region
    $region18: #{tpu_custom_call.1} parent=1 // pred_check
      _
    $region19: #{tpu_custom_call.1} parent=1 // pred_check_branch
      %33 = sbr.rel (0) target = $region21
    $region20: #{tpu_custom_call.1} parent=1 // pred_region
      _
    $region21: #{tpu_custom_call.1} parent=1 // pred_fallthru
      _
    // Predicated region
    $region22: #{tpu_custom_call.1} parent=1 // pred_check
      _
    $region23: #{tpu_custom_call.1} parent=1 // pred_check_branch
      %35 = sbr.rel (0) target = $region25
    $region24: #{tpu_custom_call.1} parent=1 // pred_region
      _
    $region25: #{tpu_custom_call.1} parent=1 // pred_fallthru
      _
    // Predicated region
    $region26: #{tpu_custom_call.1} parent=1 // pred_check
      _
    $region27: #{tpu_custom_call.1} parent=1 // pred_check_branch
      %37 = sbr.rel (0) target = $region29
    $region28: #{tpu_custom_call.1} parent=1 // pred_region
      _
    $region29: #{tpu_custom_call.1} parent=1 // pred_fallthru
      _
    // Predicated region
    $region30: #{tpu_custom_call.1} parent=1 // pred_check
      _
    $region31: #{tpu_custom_call.1} parent=1 // pred_check_branch
      %39 = sbr.rel (0) target = $region33
    $region32: #{tpu_custom_call.1} parent=1 // pred_region
      %40 = dma.done [#allocation3], 2048
    $region33: #{tpu_custom_call.1} parent=1 // pred_fallthru
      _
    %v42 = vld [vmem:[%s0] sm:$0xff]
    %v43 = vpack.c.bf16 %v42, %v42
    %v44 = vld [vmem:[%s1] sm:$0xff]
    %v45 = vld [vmem:[%s1 + $0x8] sm:$0xff]
    %v46 = vld [vmem:[%s1 + $0x10] sm:$0xff]
    %v47 = vld [vmem:[%s1 + $0x18] sm:$0xff]
    %v48 = vld [vmem:[%s2] sm:$0x3]
    %v50 = vlaneseq
    %v51 = vshrl.u32 %v50, 7
    %v52 = vsub.s32 0, %v51
    %v53 = vrot.slane %v48, %v52
    %v54 = vlaneseq
    %v55 = vshrl.u32 %v54, 7
    %v56 = vsub.s32 1, %v55
    %v57 = vrot.slane %v48, %v56
    %v64 = vunpack.c.l.b16 %v44
    %v65 = vunpack.c.h.b16 %v44
    %v66 = vunpack.c.l.b16 %v45
    %v67 = vunpack.c.h.b16 %v45
    %v68 = vunpack.c.l.b16 %v46
    %v69 = vunpack.c.h.b16 %v46
    %v70 = vunpack.c.l.b16 %v47
    %v71 = vunpack.c.h.b16 %v47
    %v72 = vpack.c.b16 %v66, %v64
    %v73 = vpack.c.b16 %v67, %v65
    %v74 = vpack.c.b16 %v70, %v68
    %v75 = vpack.c.b16 %v71, %v69
    %vm80 = vcmask 261120
    %v82 = vsel %vm80, %v43, 0
    %84 = vmatprep.subr.bf16.mxu0 %v73
    %85 = vmatpush1.bf16.msra.mxu0 %v72
    %86 = vmatprep.subr.bf16.mxu0 %v75
    %87 = vmatpush1.bf16.msra.mxu0 %v74
    %88 = vmatprep.subr.bf16.mxu0 0
    %89 = vmatpush1.bf16.msra.mxu0 0
    %90 = vmatprep.subr.bf16.mxu0 0
    %91 = vmatpush1.bf16.msra.mxu0 0
    %92 = vmatprep.subr.bf16.mxu0 0
    %93 = vmatpush1.bf16.msra.mxu0 0
    %94 = vmatprep.subr.bf16.mxu0 0
    %95 = vmatpush1.bf16.msra.mxu0 0
    %96 = vmatprep.subr.bf16.mxu0 0
    %97 = vmatpush1.bf16.msra.mxu0 0
    %98 = vmatprep.subr.bf16.mxu0 0
    %99 = vmatpush1.bf16.msra.mxu0 0
    %100 = vmatprep.subr.bf16.mxu0 0
    %101 = vmatpush1.bf16.msra.mxu0 0
    %102 = vmatprep.subr.bf16.mxu0 0
    %103 = vmatpush1.bf16.msra.mxu0 0
    %104 = vmatprep.subr.bf16.mxu0 0
    %105 = vmatpush1.bf16.msra.mxu0 0
    %106 = vmatprep.subr.bf16.mxu0 0
    %107 = vmatpush1.bf16.msra.mxu0 0
    %108 = vmatprep.subr.bf16.mxu0 0
    %109 = vmatpush1.bf16.msra.mxu0 0
    %110 = vmatprep.subr.bf16.mxu0 0
    %111 = vmatpush1.bf16.msra.mxu0 0
    %112 = vmatprep.subr.bf16.mxu0 0
    %113 = vmatpush1.bf16.msra.mxu0 0
    %114 = vmatprep.subr.bf16.mxu0 0
    %115 = vmatpush1.bf16.msra.mxu0 0
    %116 = vmatprep.mubr.bf16.mxu0 0
    %117 = vmatmul.mubr.bf16.gmra.mrb[0].mxu0 %v82
    %v118 = vpop.f32.mrb[0].mxu0
    %v119 = vadd.f32 %v53, %v118
    %v120 = vpop.f32.mrb[0].mxu0
    %v121 = vadd.f32 %v57, %v120
    %v122 = vpop.f32.mrb[0].mxu0
    %v123 = vpop.f32.mrb[0].mxu0
    %124 = vdwg.mxu0
    %v125 = vpack.c.bf16 %v119, %v119
    %v126 = vpack.c.bf16 %v121, %v121
    %v127 = vmax.bf16 %v125, 0
    %v128 = vmax.bf16 %v126, 0
    %v129 = vld [vmem:[#allocation2] sm:$0xf]
    %v130 = vld [vmem:[#allocation2 + $0x4] sm:$0xf]
    %v131 = vld [vmem:[#allocation2 + $0x8] sm:$0xf]
    %v132 = vld [vmem:[#allocation2 + $0xc] sm:$0xf]
    %v133 = vld [vmem:[#allocation2 + $0x10] sm:$0xf]
    %v134 = vld [vmem:[#allocation2 + $0x14] sm:$0xf]
    %v135 = vld [vmem:[#allocation2 + $0x18] sm:$0xf]
    %v136 = vld [vmem:[#allocation2 + $0x1c] sm:$0xf]
    %v137 = vld [vmem:[#allocation2 + $0x20] sm:$0xf]
    %v138 = vld [vmem:[#allocation2 + $0x24] sm:$0xf]
    %v139 = vld [vmem:[#allocation2 + $0x28] sm:$0xf]
    %v140 = vld [vmem:[#allocation2 + $0x2c] sm:$0xf]
    %v141 = vld [vmem:[#allocation2 + $0x30] sm:$0xf]
    %v142 = vld [vmem:[#allocation2 + $0x34] sm:$0xf]
    %v143 = vld [vmem:[#allocation2 + $0x38] sm:$0xf]
    %v144 = vld [vmem:[#allocation2 + $0x3c] sm:$0xf]
    %v145 = vld [vmem:[#allocation2 + $0x40] sm:$0xf]
    %v146 = vld [vmem:[#allocation2 + $0x44] sm:$0xf]
    %v147 = vld [vmem:[#allocation2 + $0x48] sm:$0xf]
    %v148 = vld [vmem:[#allocation2 + $0x4c] sm:$0xf]
    %v149 = vld [vmem:[#allocation2 + $0x50] sm:$0xf]
    %v150 = vld [vmem:[#allocation2 + $0x54] sm:$0xf]
    %v151 = vld [vmem:[#allocation2 + $0x58] sm:$0xf]
    %v152 = vld [vmem:[#allocation2 + $0x5c] sm:$0xf]
    %v153 = vld [vmem:[#allocation2 + $0x60] sm:$0xf]
    %v154 = vld [vmem:[#allocation2 + $0x64] sm:$0xf]
    %v155 = vld [vmem:[#allocation2 + $0x68] sm:$0xf]
    %v156 = vld [vmem:[#allocation2 + $0x6c] sm:$0xf]
    %v157 = vld [vmem:[#allocation2 + $0x70] sm:$0xf]
    %v158 = vld [vmem:[#allocation2 + $0x74] sm:$0xf]
    %v159 = vld [vmem:[#allocation2 + $0x78] sm:$0xf]
    %v160 = vld [vmem:[#allocation2 + $0x7c] sm:$0xf]
    %v161 = vld [vmem:[%s4] sm:$0x1]
    %v163 = vlaneseq
    %v164 = vshrl.u32 %v163, 7
    %v165 = vsub.s32 0, %v164
    %v166 = vrot.slane %v161, %v165
    %v200 = vunpack.c.l.b16 %v129
    %v201 = vunpack.c.l.b16 %v130
    %v202 = vunpack.c.l.b16 %v131
    %v203 = vunpack.c.l.b16 %v132
    %v204 = vunpack.c.l.b16 %v133
    %v205 = vunpack.c.l.b16 %v134
    %v206 = vunpack.c.l.b16 %v135
    %v207 = vunpack.c.l.b16 %v136
    %v208 = vunpack.c.l.b16 %v137
    %v209 = vunpack.c.l.b16 %v138
    %v210 = vunpack.c.l.b16 %v139
    %v211 = vunpack.c.l.b16 %v140
    %v212 = vunpack.c.l.b16 %v141
    %v213 = vunpack.c.l.b16 %v142
    %v214 = vunpack.c.l.b16 %v143
    %v215 = vunpack.c.l.b16 %v144
    %v216 = vunpack.c.l.b16 %v145
    %v217 = vunpack.c.l.b16 %v146
    %v218 = vunpack.c.l.b16 %v147
    %v219 = vunpack.c.l.b16 %v148
    %v220 = vunpack.c.l.b16 %v149
    %v221 = vunpack.c.l.b16 %v150
    %v222 = vunpack.c.l.b16 %v151
    %v223 = vunpack.c.l.b16 %v152
    %v224 = vunpack.c.l.b16 %v153
    %v225 = vunpack.c.l.b16 %v154
    %v226 = vunpack.c.l.b16 %v155
    %v227 = vunpack.c.l.b16 %v156
    %v228 = vunpack.c.l.b16 %v157
    %v229 = vunpack.c.l.b16 %v158
    %v230 = vunpack.c.l.b16 %v159
    %v231 = vunpack.c.l.b16 %v160
    %v232 = vpack.c.b16 %v201, %v200
    %v233 = vpack.c.b16 %v203, %v202
    %v234 = vpack.c.b16 %v205, %v204
    %v235 = vpack.c.b16 %v207, %v206
    %v236 = vpack.c.b16 %v209, %v208
    %v237 = vpack.c.b16 %v211, %v210
    %v238 = vpack.c.b16 %v213, %v212
    %v239 = vpack.c.b16 %v215, %v214
    %v240 = vpack.c.b16 %v217, %v216
    %v241 = vpack.c.b16 %v219, %v218
    %v242 = vpack.c.b16 %v221, %v220
    %v243 = vpack.c.b16 %v223, %v222
    %v244 = vpack.c.b16 %v225, %v224
    %v245 = vpack.c.b16 %v227, %v226
    %v246 = vpack.c.b16 %v229, %v228
    %v247 = vpack.c.b16 %v231, %v230
    %264 = vmatprep.subr.bf16.mxu0 0
    %265 = vmatpush1.bf16.msra.mxu0 %v232
    %266 = vmatprep.subr.bf16.mxu0 0
    %267 = vmatpush1.bf16.msra.mxu0 %v233
    %268 = vmatprep.subr.bf16.mxu0 0
    %269 = vmatpush1.bf16.msra.mxu0 %v234
    %270 = vmatprep.subr.bf16.mxu0 0
    %271 = vmatpush1.bf16.msra.mxu0 %v235
    %272 = vmatprep.subr.bf16.mxu0 0
    %273 = vmatpush1.bf16.msra.mxu0 %v236
    %274 = vmatprep.subr.bf16.mxu0 0
    %275 = vmatpush1.bf16.msra.mxu0 %v237
    %276 = vmatprep.subr.bf16.mxu0 0
    %277 = vmatpush1.bf16.msra.mxu0 %v238
    %278 = vmatprep.subr.bf16.mxu0 0
    %279 = vmatpush1.bf16.msra.mxu0 %v239
    %280 = vmatprep.subr.bf16.mxu0 0
    %281 = vmatpush1.bf16.msra.mxu0 %v240
    %282 = vmatprep.subr.bf16.mxu0 0
    %283 = vmatpush1.bf16.msra.mxu0 %v241
    %284 = vmatprep.subr.bf16.mxu0 0
    %285 = vmatpush1.bf16.msra.mxu0 %v242
    %286 = vmatprep.subr.bf16.mxu0 0
    %287 = vmatpush1.bf16.msra.mxu0 %v243
    %288 = vmatprep.subr.bf16.mxu0 0
    %289 = vmatpush1.bf16.msra.mxu0 %v244
    %290 = vmatprep.subr.bf16.mxu0 0
    %291 = vmatpush1.bf16.msra.mxu0 %v245
    %292 = vmatprep.subr.bf16.mxu0 0
    %293 = vmatpush1.bf16.msra.mxu0 %v246
    %294 = vmatprep.subr.bf16.mxu0 0
    %295 = vmatpush1.bf16.msra.mxu0 %v247
    %296 = vmatprep.mubr.bf16.mxu0 %v128
    %297 = vmatmul.mubr.bf16.gmra.mrb[0].mxu0 %v127
    %v298 = vpop.f32.mrb[0].mxu0
    %v299 = vadd.f32 %v166, %v298
    %v300 = vpop.f32.mrb[0].mxu0
    %v301 = vpop.f32.mrb[0].mxu0
    %v302 = vpop.f32.mrb[0].mxu0
    %303 = vdwg.mxu0
    %v304 = vpack.c.bf16 %v299, %v299
    %v305 = vmax.bf16 %v304, 0
    %v306 = vld [vmem:[%s5] sm:$0xf]
    %v307 = vld [vmem:[%s5 + $0x4] sm:$0xf]
    %v308 = vld [vmem:[%s5 + $0x8] sm:$0xf]
    %v309 = vld [vmem:[%s5 + $0xc] sm:$0xf]
    %v310 = vld [vmem:[%s5 + $0x10] sm:$0xf]
    %v311 = vld [vmem:[%s5 + $0x14] sm:$0xf]
    %v312 = vld [vmem:[%s5 + $0x18] sm:$0xf]
    %v313 = vld [vmem:[%s5 + $0x1c] sm:$0xf]
    %v314 = vld [vmem:[%s5 + $0x20] sm:$0xf]
    %v315 = vld [vmem:[%s5 + $0x24] sm:$0xf]
    %v316 = vld [vmem:[%s5 + $0x28] sm:$0xf]
    %v317 = vld [vmem:[%s5 + $0x2c] sm:$0xf]
    %v318 = vld [vmem:[%s5 + $0x30] sm:$0xf]
    %v319 = vld [vmem:[%s5 + $0x34] sm:$0xf]
    %v320 = vld [vmem:[%s5 + $0x38] sm:$0xf]
    %v321 = vld [vmem:[%s5 + $0x3c] sm:$0xf]
    %v322 = vld [vmem:[%s6] sm:$0x1]
    %v324 = vlaneseq
    %v325 = vshrl.u32 %v324, 7
    %v326 = vsub.s32 0, %v325
    %v327 = vrot.slane %v322, %v326
    %v345 = vunpack.c.l.b16 %v306
    %v346 = vunpack.c.l.b16 %v307
    %v347 = vunpack.c.l.b16 %v308
    %v348 = vunpack.c.l.b16 %v309
    %v349 = vunpack.c.l.b16 %v310
    %v350 = vunpack.c.l.b16 %v311
    %v351 = vunpack.c.l.b16 %v312
    %v352 = vunpack.c.l.b16 %v313
    %v353 = vunpack.c.l.b16 %v314
    %v354 = vunpack.c.l.b16 %v315
    %v355 = vunpack.c.l.b16 %v316
    %v356 = vunpack.c.l.b16 %v317
    %v357 = vunpack.c.l.b16 %v318
    %v358 = vunpack.c.l.b16 %v319
    %v359 = vunpack.c.l.b16 %v320
    %v360 = vunpack.c.l.b16 %v321
    %v361 = vpack.c.b16 %v346, %v345
    %v362 = vpack.c.b16 %v348, %v347
    %v363 = vpack.c.b16 %v350, %v349
    %v364 = vpack.c.b16 %v352, %v351
    %v365 = vpack.c.b16 %v354, %v353
    %v366 = vpack.c.b16 %v356, %v355
    %v367 = vpack.c.b16 %v358, %v357
    %v368 = vpack.c.b16 %v360, %v359
    %377 = vmatprep.subr.bf16.mxu0 0
    %378 = vmatpush1.bf16.msra.mxu0 %v361
    %379 = vmatprep.subr.bf16.mxu0 0
    %380 = vmatpush1.bf16.msra.mxu0 %v362
    %381 = vmatprep.subr.bf16.mxu0 0
    %382 = vmatpush1.bf16.msra.mxu0 %v363
    %383 = vmatprep.subr.bf16.mxu0 0
    %384 = vmatpush1.bf16.msra.mxu0 %v364
    %385 = vmatprep.subr.bf16.mxu0 0
    %386 = vmatpush1.bf16.msra.mxu0 %v365
    %387 = vmatprep.subr.bf16.mxu0 0
    %388 = vmatpush1.bf16.msra.mxu0 %v366
    %389 = vmatprep.subr.bf16.mxu0 0
    %390 = vmatpush1.bf16.msra.mxu0 %v367
    %391 = vmatprep.subr.bf16.mxu0 0
    %392 = vmatpush1.bf16.msra.mxu0 %v368
    %393 = vmatprep.subr.bf16.mxu0 0
    %394 = vmatpush1.bf16.msra.mxu0 0
    %395 = vmatprep.subr.bf16.mxu0 0
    %396 = vmatpush1.bf16.msra.mxu0 0
    %397 = vmatprep.subr.bf16.mxu0 0
    %398 = vmatpush1.bf16.msra.mxu0 0
    %399 = vmatprep.subr.bf16.mxu0 0
    %400 = vmatpush1.bf16.msra.mxu0 0
    %401 = vmatprep.subr.bf16.mxu0 0
    %402 = vmatpush1.bf16.msra.mxu0 0
    %403 = vmatprep.subr.bf16.mxu0 0
    %404 = vmatpush1.bf16.msra.mxu0 0
    %405 = vmatprep.subr.bf16.mxu0 0
    %406 = vmatpush1.bf16.msra.mxu0 0
    %407 = vmatprep.subr.bf16.mxu0 0
    %408 = vmatpush1.bf16.msra.mxu0 0
    %409 = vmatprep.mubr.bf16.mxu0 0
    %410 = vmatmul.mubr.bf16.gmra.mrb[0].mxu0 %v305
    %v411 = vpop.f32.mrb[0].mxu0
    %v412 = vadd.f32 %v327, %v411
    %v413 = vpop.f32.mrb[0].mxu0
    %v414 = vpop.f32.mrb[0].mxu0
    %v415 = vpop.f32.mrb[0].mxu0
    %416 = vdwg.mxu0
    %vm417 = vcmask 64512
    %418 = vst.msk [vmem:[#allocation5] sm:$0xff] %vm417, %v412
    // Predicated region
    $region34: #{tpu_custom_call.1} parent=1 // pred_check
      _
    $region35: #{tpu_custom_call.1} parent=1 // pred_check_branch
      %420 = sbr.rel (0) target = $region37
    $region36: #{tpu_custom_call.1} parent=1 // pred_region
      %s422 = ssub.s32 128, 128
      %423 = vsyncadd [#allocation4], %s422
      %s425 = sshll.u32 [#allocation5], 4
      %s426 = int_to_ptr.vmem [resolvable:$true] %s425
      %428 = dma.vmem_to_hbm [thread:$0]  %s426, 128, %s7, [#allocation4]
    $region37: #{tpu_custom_call.1} parent=1 // pred_fallthru
      _
    // Predicated region
    $region38: #{tpu_custom_call.1} parent=1 // pred_check
      _
    $region39: #{tpu_custom_call.1} parent=1 // pred_check_branch
      %430 = sbr.rel (0) target = $region41
    $region40: #{tpu_custom_call.1} parent=1 // pred_region
      %431 = dma.done [#allocation4], 128
    $region41: #{tpu_custom_call.1} parent=1 // pred_fallthru
      _
    %432 = vsyncpa [#allocation3], 1
    %433 = vsyncpa [#allocation4], 1

</llo_original>
